<compile_context>
chip_gen: v6e
topology: v6e:2x2x1
jax: 0.10.0
libtpu: 0.0.40
codegen_flags: <defaults>
</compile_context>

<pallas_src>
import functools
import math

import jax
import jax.numpy as jnp
from jax.experimental import pallas as pl
from jax.experimental.pallas import tpu as pltpu

_NEG = -1e30  # finite "-inf" pad value (avoids 0 * inf -> NaN in gathers)


def _round_up(x, m):
    return ((x + m - 1) // m) * m


# --------------------------------------------------------------------------
# Kernel 1: batch label histogram -> updated cum_samples buffer
# --------------------------------------------------------------------------
def _hist_kernel(labels_ref, cum_in_ref, cum_out_ref):
    i = pl.program_id(0)

    @pl.when(i == 0)
    def _init():
        cum_out_ref[...] = cum_in_ref[...]

    labels = labels_ref[...]                                   # (Tn, 1) int32
    tn = labels.shape[0]
    c = cum_out_ref.shape[1]
    class_ids = jax.lax.broadcasted_iota(jnp.int32, (tn, c), 1)
    onehot = (class_ids == labels).astype(jnp.float32)         # pad label -1 never hits
    cum_out_ref[...] += jnp.sum(onehot, axis=0, keepdims=True)


# --------------------------------------------------------------------------
# Kernel 2: seesaw cross-entropy over one tile of N rows (log-domain seesaw)
# --------------------------------------------------------------------------
def _loss_kernel(p, q, eps, scale,
                 cls_ref, labels_ref, w_ref, cum_ref, loss_ref):
    i = pl.program_id(0)

    @pl.when(i == 0)
    def _init():
        loss_ref[...] = jnp.zeros_like(loss_ref)

    cls = cls_ref[...].astype(jnp.float32)                     # (Tn, C)
    labels = labels_ref[...]                                   # (Tn, 1) int32
    w = w_ref[...]                                             # (Tn, 1) f32
    tn, c = cls.shape

    class_ids = jax.lax.broadcasted_iota(jnp.int32, (tn, c), 1)
    onehot = (class_ids == labels).astype(jnp.float32)         # (Tn, C)

    # Fused one-hot gather of the label logit; reused twice below.
    gathered_cls = jnp.sum(onehot * cls, axis=1, keepdims=True)   # (Tn, 1)

    log_seesaw = jnp.zeros((tn, c), jnp.float32)

    # --- mitigation factor (log domain) ---
    cumc = jnp.maximum(cum_ref[...], 1.0)                      # (1, C)  clamp(min=1)
    log_cumc = jnp.log(cumc)                                   # (1, C)
    if p > 0:
        log_cum_lab = jnp.sum(onehot * log_cumc, axis=1, keepdims=True)   # (Tn, 1)
        d = log_cumc - log_cum_lab                                        # (Tn, C)
        log_seesaw = log_seesaw + jnp.where(d < 0.0, p * d, 0.0)

    # --- compensation factor (log domain, softmax never normalized) ---
    m = jnp.max(cls, axis=1, keepdims=True)
    log_z = m + jnp.log(jnp.sum(jnp.exp(cls - m), axis=1, keepdims=True))  # (Tn, 1)
    if q > 0:
        # clamp(self_score, min=eps)  <=>  max(log_self, log(eps))
        log_self = jnp.maximum(gathered_cls - log_z, math.log(eps))        # (Tn, 1)
        log_sm = (cls - log_z) - log_self                                  # (Tn, C)
        log_seesaw = log_seesaw + jnp.where(log_sm > 0.0, q * log_sm, 0.0)

    # --- adjusted logits + cross entropy ---
    adj = cls + log_seesaw * (1.0 - onehot)
    m2 = jnp.max(adj, axis=1, keepdims=True)
    lse_adj = m2 + jnp.log(jnp.sum(jnp.exp(adj - m2), axis=1, keepdims=True))

    # adj at the label column equals cls at the label column -> reuse gather.
    per_sample = (lse_adj - gathered_cls) * w                              # (Tn, 1)
    tile_sum = jnp.sum(per_sample, axis=0, keepdims=True)                  # (1, 1)
    loss_ref[...] += scale * tile_sum


# --------------------------------------------------------------------------
# Wrapper
# --------------------------------------------------------------------------
def seesaw_loss(cls_score, labels, cum_samples, weight=None,
                p=0.8, q=2.0, eps=0.01, loss_weight=1.0, reduction='mean',
                avg_factor=None, tile_n=256):
    """Returns (loss, updated_cum_samples).  reduction in {'mean', 'sum'}."""
    assert reduction in ('mean', 'sum'), "reduction='none' not supported (TODO)"
    N, C = cls_score.shape

    # Lane-pad C to a multiple of 128; pad/tile N in multiples of 8.
    C_pad = _round_up(C, 128)
    if N <= tile_n:
        N_pad = _round_up(N, 8)
        tile_n = N_pad
    else:
        N_pad = _round_up(N, tile_n)
    n_tiles = N_pad // tile_n
    pad_n, pad_c = N_pad - N, C_pad - C

    # Keep cls in its native dtype (bf16 stays bf16); cast to f32 in-kernel.
    cls_p = jnp.pad(cls_score, ((0, pad_n), (0, pad_c)), constant_values=_NEG)
    labels_p = jnp.pad(labels.reshape(N).astype(jnp.int32), (0, pad_n),
                       constant_values=-1).reshape(N_pad, 1)
    if weight is None:
        weight = jnp.ones((N,), jnp.float32)
    w_p = jnp.pad(weight.reshape(N).astype(jnp.float32),
                  (0, pad_n)).reshape(N_pad, 1)
    cum_p = jnp.pad(cum_samples.reshape(1, C).astype(jnp.float32),
                    ((0, 0), (0, pad_c)))

    # ---- pass 1: full-batch histogram update of cum_samples ----
    cum_new = pl.pallas_call(
        _hist_kernel,
        out_shape=jax.ShapeDtypeStruct((1, C_pad), jnp.float32),
        grid=(n_tiles,),
        in_specs=[pl.BlockSpec((tile_n, 1), lambda i: (i, 0)),
                  pl.BlockSpec((1, C_pad), lambda i: (0, 0))],
        out_specs=pl.BlockSpec((1, C_pad), lambda i: (0, 0)),
        compiler_params=pltpu.CompilerParams(
            dimension_semantics=("arbitrary",)),
    )(labels_p, cum_p)

    # ---- pass 2: tiled loss reduction ----
    if reduction == 'mean':
        denom = float(avg_factor) if avg_factor is not None else float(N)
        scale = float(loss_weight) / denom
    else:
        scale = float(loss_weight)

    # Rough tile VMEM budget (f32 temps + double-buffered inputs), clamped.
    est = tile_n * C_pad * 4 * 12 + 8 * C_pad * 4
    vmem_limit = int(min(48 * 2**20, max(16 * 2**20, 3 * est)))

    kernel = functools.partial(_loss_kernel, p, q, eps, scale)
    loss = pl.pallas_call(
        kernel,
        out_shape=jax.ShapeDtypeStruct((1, 1), jnp.float32),
        grid=(n_tiles,),
        in_specs=[pl.BlockSpec((tile_n, C_pad), lambda i: (i, 0)),
                  pl.BlockSpec((tile_n, 1), lambda i: (i, 0)),
                  pl.BlockSpec((tile_n, 1), lambda i: (i, 0)),
                  pl.BlockSpec((1, C_pad), lambda i: (0, 0))],
        out_specs=pl.BlockSpec((1, 1), lambda i: (0, 0)),
        compiler_params=pltpu.CompilerParams(
            dimension_semantics=("arbitrary",),
            vmem_limit_bytes=vmem_limit),
    )(cls_p, labels_p, w_p, cum_new)

    return loss[0, 0], cum_new[0, :C]


# --------------------------------------------------------------------------
# Pure-JAX reference mirroring the PyTorch code
# --------------------------------------------------------------------------
def _reference(cls_score, labels, cum_samples, p, q, eps, loss_weight):
    N, C = cls_score.shape
    onehot = jax.nn.one_hot(labels, C, dtype=jnp.float32)
    cum_new = cum_samples + jnp.sum(onehot, axis=0)
    cumc = jnp.maximum(cum_new, 1.0)
    seesaw = jnp.ones((N, C), jnp.float32)
    ratio = cumc[None, :] / cumc[:, None]
    sw = jnp.where(ratio < 1.0, ratio ** p, 1.0)
    seesaw = seesaw * sw[labels, :]
    scores = jax.nn.softmax(cls_score, axis=1)
    self_scores = scores[jnp.arange(N), labels]
    sm = scores / jnp.maximum(self_scores, eps)[:, None]
    comp = jnp.where(sm > 1.0, sm ** q, 1.0)
    seesaw = seesaw * comp
    adj = cls_score + jnp.log(seesaw) * (1.0 - onehot)
    logp = jax.nn.log_softmax(adj, axis=1)
    per = -jnp.sum(onehot * logp, axis=1)
    return loss_weight * jnp.mean(per), cum_new


if __name__ == "__main__":
    N, C = 8, 16  # batch, num_classes (small demo shapes)
    key = jax.random.PRNGKey(0)
    k1, k2 = jax.random.split(key)
    cls_score = jax.random.normal(k1, (N, C), dtype=jnp.float32)
    labels = jax.random.randint(k2, (N,), 0, C, dtype=jnp.int32)
    cum_samples = jnp.zeros((C,), jnp.float32)  # registered buffer init

    loss, cum_new = seesaw_loss(cls_score, labels, cum_samples,
                                p=0.8, q=2.0, eps=0.01, loss_weight=1.0,
                                reduction='mean')
    jax.block_until_ready((loss, cum_new))

    ref_loss, ref_cum = _reference(cls_score, labels, cum_samples,
                                   p=0.8, q=2.0, eps=0.01, loss_weight=1.0)
    assert jnp.allclose(loss, ref_loss, rtol=1e-4, atol=1e-5), (loss, ref_loss)
    assert jnp.allclose(cum_new, ref_cum), (cum_new, ref_cum)
    print("KERNEL_OK")
</pallas_src>

<mosaic_0001>
module attributes {stable_mosaic.version = 11 : i64} {
  func.func @_hist_kernel(%arg0: i32, %arg1: memref<8x1xi32, #tpu.memory_space<vmem>>, %arg2: memref<1x128xf32, #tpu.memory_space<vmem>>, %arg3: memref<1x128xf32, #tpu.memory_space<vmem>>) attributes {dimension_semantics = [#tpu.dimension_semantics<arbitrary>], iteration_bounds = array<i64: 1>, scalar_prefetch = 0 : i64, scratch_operands = 0 : i64, tpu.core_type = #tpu.core_type<tc>, window_params = [{transform_indices = @transform_0, window_bounds = array<i64: 8, 1>}, {pipeline_mode = #tpu.pipeline_mode<synchronous>, transform_indices = @transform_1, window_bounds = array<i64: 1, 128>}, {pipeline_mode = #tpu.pipeline_mode<synchronous>, transform_indices = @transform_2, window_bounds = array<i64: 1, 128>}]} {
    %c0_i32 = arith.constant 0 : i32
    %0 = arith.cmpi eq, %arg0, %c0_i32 : i32
    %1 = arith.extui %0 : i1 to i32
    %c0_i32_0 = arith.constant 0 : i32
    %2 = arith.cmpi ne, %1, %c0_i32_0 : i32
    scf.if %2 {
      %c0_6 = arith.constant 0 : index
      %c0_7 = arith.constant 0 : index
      %14 = vector.load %arg2[%c0_6, %c0_7] : memref<1x128xf32, #tpu.memory_space<vmem>>, vector<1x128xf32>
      %c0_8 = arith.constant 0 : index
      %c0_9 = arith.constant 0 : index
      %15 = vector.load %arg3[%c0_8, %c0_9] : memref<1x128xf32, #tpu.memory_space<vmem>>, vector<1x128xf32>
      tpu.vector_store %arg3[%c0_8, %c0_9], %14 {strides = array<i32>} : memref<1x128xf32, #tpu.memory_space<vmem>>, vector<1x128xf32>,
    } else {
    }
    %c0 = arith.constant 0 : index
    %c0_1 = arith.constant 0 : index
    %3 = vector.load %arg1[%c0, %c0_1] : memref<8x1xi32, #tpu.memory_space<vmem>>, vector<8x1xi32>
    %4 = tpu.iota {dimensions = array<i32: 1>} : vector<8x128xi32>
    %5 = vector.broadcast %3 : vector<8x1xi32> to vector<8x128xi32>
    %6 = arith.cmpi eq, %4, %5 : vector<8x128xi32>
    %7 = arith.extui %6 : vector<8x128xi1> to vector<8x128xi32>
    %8 = arith.sitofp %7 : vector<8x128xi32> to vector<8x128xf32>
    %c0_2 = arith.constant 0 : index
    %c0_3 = arith.constant 0 : index
    %9 = vector.load %arg3[%c0_2, %c0_3] : memref<1x128xf32, #tpu.memory_space<vmem>>, vector<1x128xf32>
    %cst = arith.constant dense<0.000000e+00> : vector<128xf32>
    %10 = vector.multi_reduction <add>, %8, %cst [0] : vector<8x128xf32> to vector<128xf32>
    %11 = vector.shape_cast %10 : vector<128xf32> to vector<1x128xf32>
    %12 = arith.addf %9, %11 : vector<1x128xf32>
    %c0_4 = arith.constant 0 : index
    %c0_5 = arith.constant 0 : index
    %13 = vector.load %arg3[%c0_4, %c0_5] : memref<1x128xf32, #tpu.memory_space<vmem>>, vector<1x128xf32>
    tpu.vector_store %arg3[%c0_4, %c0_5], %12 {strides = array<i32>} : memref<1x128xf32, #tpu.memory_space<vmem>>, vector<1x128xf32>,
    return
  }
  func.func @transform_0(%arg0: i32) -> (i32, i32) {
    %c0_i32 = arith.constant 0 : i32
    %c0_i32_0 = arith.constant 0 : i32
    return %arg0, %c0_i32 : i32, i32
  }
  func.func @transform_1(%arg0: i32) -> (i32, i32) {
    %c0_i32 = arith.constant 0 : i32
    %c0_i32_0 = arith.constant 0 : i32
    %c0_i32_1 = arith.constant 0 : i32
    return %c0_i32, %c0_i32_0 : i32, i32
  }
  func.func @transform_2(%arg0: i32) -> (i32, i32) {
    %c0_i32 = arith.constant 0 : i32
    %c0_i32_0 = arith.constant 0 : i32
    %c0_i32_1 = arith.constant 0 : i32
    return %c0_i32, %c0_i32_0 : i32, i32
  }
}

</mosaic_0001>

<llo_original>
// kernel: tpu_custom_call.1
$region0: #{tpu_custom_call.1}
  #allocation0 [shape = 'u32[]', space=smem, size = 0x4, offset = 0x4, fixed_abs, tag = 'smem constant byte address 0x4 - core index']
  #allocation1 [shape = 'u32[144,128]{1,0:T(1,128)}', space=vmem, size = 0x12000, scoped, tag = 'internal scratch']
  %s0 = inlined_call_operand.vmem [shape: s32[8,1], index: 0, kind: input, shape index: {}]
  %s1 = inlined_call_operand.vmem [shape: f32[1,128], index: 1, kind: input, shape index: {}]
  %s2 = inlined_call_operand.hbm [shape: f32[1,128], index: 2, kind: output, shape index: {}]
  %s3 = sld [smem:[#allocation0]]
  $region22: #{tpu_custom_call.1} parent=0
    _
  %s5 = ssub.s32 1, %s3
  %s6 = scalar_select 0, %s5, %s3
  $region1: #{tpu_custom_call.1} parent=0
    #allocation2 [shape = 'u8[512]{0}', space=vmem, size = 0x400, scoped, tag = 'output window, operand 0, single buffered']
    #allocation3 [shape = 's32[1]{0}', space=sflag, size = 0x4, scoped, tag = 'scoped memory for tpu_custom_call.1']
    %7 = vsyncpa [#allocation3], 0
    // Predicated region
    $region2: #{tpu_custom_call.1} parent=1 // pred_check
      _
    $region3: #{tpu_custom_call.1} parent=1 // pred_check_branch
      %9 = sbr.rel (0) target = $region5
    $region4: #{tpu_custom_call.1} parent=1 // pred_region
      _
    $region5: #{tpu_custom_call.1} parent=1 // pred_fallthru
      _
    // Predicated region
    $region6: #{tpu_custom_call.1} parent=1 // pred_check
      _
    $region7: #{tpu_custom_call.1} parent=1 // pred_check_branch
      %11 = sbr.rel (0) target = $region9
    $region8: #{tpu_custom_call.1} parent=1 // pred_region
      _
    $region9: #{tpu_custom_call.1} parent=1 // pred_fallthru
      _
    %p12 = scmp.eq.s32.totalorder 0, 0
    // Predicated region
    $region10: #{tpu_custom_call.1} parent=1 // pred_check
      %p13 = pneg %p12
    $region11: #{tpu_custom_call.1} parent=1 // pred_check_branch
      %15 = sbr.rel (%p13) target = $region13
    $region12: #{tpu_custom_call.1} parent=1 // pred_region
      %v16 = vld [vmem:[%s1] sm:$0x1]
      %17 = vst [vmem:[#allocation2] sm:$0x1] %v16
    $region13: #{tpu_custom_call.1} parent=1 // pred_fallthru
      _
    %v18 = vld [vmem:[%s0] sm:$0xff]
    %v19 = vlaneseq
    %v20 = vand.u32 %v19, 127
    %21 = vset.pattern.permute.xlu0 0
    %22 = vperm.xlu0 %21, %v18
    %v23 = vpop.permute.xlu0 %22
    %vm24 = vcmp.eq.s32.totalorder %v20, %v23
    %v25 = vsel %vm24, 1, 0
    %v26 = vcvt.s32.f32 %v25
    %v27 = vld [vmem:[#allocation2] sm:$0x1]
    %v28 = vrot.slane %v26, 4
    %v29 = vadd.f32 %v26, %v28
    %v30 = vrot.slane %v29, 2
    %v31 = vadd.f32 %v29, %v30
    %v32 = vrot.slane %v31, 1
    %v33 = vadd.f32 %v31, %v32
    %v34 = vadd.f32 %v27, %v33
    %35 = vst [vmem:[#allocation2] sm:$0x1] %v34
    // Predicated region
    $region14: #{tpu_custom_call.1} parent=1 // pred_check
      _
    $region15: #{tpu_custom_call.1} parent=1 // pred_check_branch
      %37 = sbr.rel (0) target = $region17
    $region16: #{tpu_custom_call.1} parent=1 // pred_region
      %s39 = ssub.s32 16, 16
      %40 = vsyncadd [#allocation3], %s39
      %s42 = sshll.u32 [#allocation2], 4
      %s43 = int_to_ptr.vmem [resolvable:$true] %s42
      %45 = dma.vmem_to_hbm [thread:$0]  %s43, 16, %s2, [#allocation3]
    $region17: #{tpu_custom_call.1} parent=1 // pred_fallthru
      _
    // Predicated region
    $region18: #{tpu_custom_call.1} parent=1 // pred_check
      _
    $region19: #{tpu_custom_call.1} parent=1 // pred_check_branch
      %47 = sbr.rel (0) target = $region21
    $region20: #{tpu_custom_call.1} parent=1 // pred_region
      %48 = dma.done [#allocation3], 16
    $region21: #{tpu_custom_call.1} parent=1 // pred_fallthru
      _
    %49 = vsyncpa [#allocation3], 1

</llo_original>
